<compile_context>
chip_gen: v7x
topology: tpu7x:2x2x1
jax: 0.10.0
libtpu: 0.0.40
codegen_flags: <defaults>
</compile_context>

<pallas_src>
import functools

import jax
import jax.numpy as jnp
from jax.experimental import pallas as pl
from jax.experimental.pallas import tpu as pltpu


def _round_up(x, m):
    return (x + m - 1) // m * m


def _gemma_mlp_kernel(x_ref, wgu_ref, wd_ref, o_ref, acc_ref):
    """Grid = (token_tiles, I_tiles). Shapes seen by the kernel:
         x_ref  : (TM, H)        token tile (resident across the I axis)
         wgu_ref: (2, H, TI)     stacked gate/up weight tile
         wd_ref : (TI, H)        down_proj weight tile
         o_ref  : (TM, H)        output tile (resident across the I axis)
         acc_ref: (TM, H) f32    down-proj accumulator scratch
    """
    k = pl.program_id(1)

    @pl.when(k == 0)
    def _():
        acc_ref[...] = jnp.zeros_like(acc_ref)

    x = x_ref[...]
    # gate / up projections for this slice of the intermediate dimension (MXU, f32 accum).
    gate = jnp.dot(x, wgu_ref[0], preferred_element_type=jnp.float32)
    up = jnp.dot(x, wgu_ref[1], preferred_element_type=jnp.float32)
    # tanh-approximate GELU (matches F.gelu(..., approximate='tanh')), elementwise in f32.
    gate = jax.nn.gelu(gate, approximate=True)
    hidden = (gate * up).astype(wd_ref.dtype)
    acc_ref[...] += jnp.dot(hidden, wd_ref[...], preferred_element_type=jnp.float32)

    @pl.when(k == pl.num_programs(1) - 1)
    def _():
        o_ref[...] = acc_ref[...].astype(o_ref.dtype)


@functools.partial(jax.jit, static_argnames=("tm", "ti", "param_dtype"))
def gemma_mlp(x, w_gate, w_up, w_down, *, tm=256, ti=512, param_dtype=jnp.bfloat16):
    """GemmaMLP forward.

    x       : (..., H)
    w_gate  : (H, I)   gate_proj weight, pre-transposed (nn.Linear stores (I, H))
    w_up    : (H, I)   up_proj weight,  pre-transposed
    w_down  : (I, H)   down_proj weight, pre-transposed
    returns : (..., H) in x.dtype
    """
    orig_shape = x.shape
    H = orig_shape[-1]
    I = w_gate.shape[1]
    x2d = x.reshape(-1, H)
    T = x2d.shape[0]
    out_dtype = x.dtype

    # --- tile sizes / padding (ragged-safe) -----------------------------------
    tm = max(8, tm)
    T_pad = _round_up(T, tm)
    ti_eff = min(ti, _round_up(I, 128))
    I_pad = _round_up(I, ti_eff)

    # --- cast matmul operands to the MXU dtype, pad, fuse gate/up -------------
    xb = x2d.astype(param_dtype)
    wg = w_gate.astype(param_dtype)
    wu = w_up.astype(param_dtype)
    wd = w_down.astype(param_dtype)
    if T_pad != T:
        xb = jnp.pad(xb, ((0, T_pad - T), (0, 0)))
    if I_pad != I:
        wg = jnp.pad(wg, ((0, 0), (0, I_pad - I)))
        wu = jnp.pad(wu, ((0, 0), (0, I_pad - I)))
        wd = jnp.pad(wd, ((0, I_pad - I), (0, 0)))
    # One DMA stream for both projections (store weights pre-fused in production).
    wgu = jnp.stack([wg, wu], axis=0)  # (2, H, I_pad)

    grid = (T_pad // tm, I_pad // ti_eff)

    bytes_per = jnp.dtype(param_dtype).itemsize
    cost = pl.CostEstimate(
        flops=6 * T_pad * H * I_pad,
        transcendentals=T_pad * I_pad,  # one tanh per gelu element
        bytes_accessed=(3 * H * I_pad + 2 * T_pad * H) * bytes_per,
    )

    out = pl.pallas_call(
        _gemma_mlp_kernel,
        out_shape=jax.ShapeDtypeStruct((T_pad, H), out_dtype),
        grid_spec=pltpu.PrefetchScalarGridSpec(
            num_scalar_prefetch=0,
            grid=grid,
            in_specs=[
                pl.BlockSpec((tm, H), lambda i, k: (i, 0)),            # token tile (resident over k)
                pl.BlockSpec((2, H, ti_eff), lambda i, k: (0, 0, k)),  # stacked gate/up weight tile
                pl.BlockSpec((ti_eff, H), lambda i, k: (k, 0)),        # down_proj weight tile
            ],
            out_specs=pl.BlockSpec((tm, H), lambda i, k: (i, 0)),      # resident over reduction
            scratch_shapes=[pltpu.VMEM((tm, H), jnp.float32)],
        ),
        compiler_params=pltpu.CompilerParams(
            dimension_semantics=("parallel", "arbitrary"),
            vmem_limit_bytes=48 * 1024 * 1024,  # fits v7x's 64 MiB VMEM with headroom
        ),
        cost_estimate=cost,
    )(xb, wgu, wd)

    if T_pad != T:
        out = out[:T]
    return out.reshape(orig_shape)


def gemma_mlp_reference(x, w_gate, w_up, w_down, param_dtype=jnp.bfloat16):
    """Pure-JAX reference mirroring the kernel's bf16-operand / f32-accumulate math."""
    orig_shape = x.shape
    H = orig_shape[-1]
    x2d = x.reshape(-1, H).astype(param_dtype)
    wg = w_gate.astype(param_dtype)
    wu = w_up.astype(param_dtype)
    wd = w_down.astype(param_dtype)
    gate = jnp.dot(x2d, wg, preferred_element_type=jnp.float32)
    gate = jax.nn.gelu(gate, approximate=True)
    up = jnp.dot(x2d, wu, preferred_element_type=jnp.float32)
    hidden = (gate * up).astype(param_dtype)
    out = jnp.dot(hidden, wd, preferred_element_type=jnp.float32)
    return out.astype(x.dtype).reshape(orig_shape)


if __name__ == "__main__":
    # Small shapes consistent with the module: batch=2, seq=8, hidden=32, intermediate=64.
    batch, seq, hidden_size, intermediate_size = 2, 8, 32, 64

    key = jax.random.PRNGKey(0)
    kx, kg, ku, kd = jax.random.split(key, 4)

    x = jax.random.normal(kx, (batch, seq, hidden_size), dtype=jnp.float32)

    # nn.Linear(in, out, bias=False) stores weight of shape (out, in); we keep it
    # transposed as (in, out) so the kernel computes x @ W^T directly.
    w_gate = jax.random.normal(kg, (hidden_size, intermediate_size), jnp.float32) * 0.05
    w_up = jax.random.normal(ku, (hidden_size, intermediate_size), jnp.float32) * 0.05
    w_down = jax.random.normal(kd, (intermediate_size, hidden_size), jnp.float32) * 0.05

    out = gemma_mlp(x, w_gate, w_up, w_down)
    jax.block_until_ready(out)

    ref = gemma_mlp_reference(x, w_gate, w_up, w_down)
    assert out.shape == x.shape
    max_err = jnp.max(jnp.abs(out - ref))
    assert jnp.allclose(out, ref, atol=1e-2, rtol=1e-2), (
        f"Pallas kernel mismatch vs reference: max abs err {max_err}"
    )

    print("KERNEL_OK")
</pallas_src>

<mosaic_0001>
module attributes {stable_mosaic.version = 11 : i64} {
  func.func @_gemma_mlp_kernel(%arg0: i32, %arg1: i32, %arg2: memref<256x32xbf16, #tpu.memory_space<vmem>>, %arg3: memref<2x32x128xbf16, #tpu.memory_space<vmem>>, %arg4: memref<128x32xbf16, #tpu.memory_space<vmem>>, %arg5: memref<256x32xf32, #tpu.memory_space<vmem>>, %arg6: memref<256x32xf32, #tpu.memory_space<vmem>>) attributes {dimension_semantics = [#tpu.dimension_semantics<parallel>, #tpu.dimension_semantics<arbitrary>], iteration_bounds = array<i64: 1, 1>, scalar_prefetch = 0 : i64, scratch_operands = 1 : i64, tpu.core_type = #tpu.core_type<tc>, window_params = [{transform_indices = @transform_0, window_bounds = array<i64: 256, 32>}, {transform_indices = @transform_1, window_bounds = array<i64: 2, 32, 128>}, {transform_indices = @transform_2, window_bounds = array<i64: 128, 32>}, {transform_indices = @transform_3, window_bounds = array<i64: 256, 32>}]} {
    %c0_i32 = arith.constant 0 : i32
    %0 = arith.cmpi eq, %arg1, %c0_i32 : i32
    %1 = arith.extui %0 : i1 to i32
    %c0_i32_0 = arith.constant 0 : i32
    %2 = arith.cmpi ne, %1, %c0_i32_0 : i32
    scf.if %2 {
      %cst_21 = arith.constant 0.000000e+00 : f32
      %33 = vector.broadcast %cst_21 : f32 to vector<256x32xf32>
      %c0_22 = arith.constant 0 : index
      %c0_23 = arith.constant 0 : index
      %34 = vector.load %arg6[%c0_22, %c0_23] : memref<256x32xf32, #tpu.memory_space<vmem>>, vector<256x32xf32>
      tpu.vector_store %arg6[%c0_22, %c0_23], %33 {strides = array<i32>} : memref<256x32xf32, #tpu.memory_space<vmem>>, vector<256x32xf32>,
    } else {
    }
    %c0 = arith.constant 0 : index
    %c0_1 = arith.constant 0 : index
    %3 = vector.load %arg2[%c0, %c0_1] : memref<256x32xbf16, #tpu.memory_space<vmem>>, vector<256x32xbf16>
    %c0_2 = arith.constant 0 : index
    %c0_3 = arith.constant 0 : index
    %c0_4 = arith.constant 0 : index
    %4 = vector.load %arg3[%c0_2, %c0_3, %c0_4] : memref<2x32x128xbf16, #tpu.memory_space<vmem>>, vector<1x32x128xbf16>
    %5 = vector.shape_cast %4 : vector<1x32x128xbf16> to vector<32x128xbf16>
    %cst = arith.constant dense<0.000000e+00> : vector<256x128xf32>
    %6 = tpu.matmul %3, %5, %cst {dimension_numbers = #tpu.dot_dimension_numbers<[1], [0], [0], [1], [0, 0, 1, 1], [], []>} : vector<256x32xbf16>, vector<32x128xbf16>, vector<256x128xf32> -> vector<256x128xf32>
    %c1 = arith.constant 1 : index
    %c0_5 = arith.constant 0 : index
    %c0_6 = arith.constant 0 : index
    %7 = vector.load %arg3[%c1, %c0_5, %c0_6] : memref<2x32x128xbf16, #tpu.memory_space<vmem>>, vector<1x32x128xbf16>
    %8 = vector.shape_cast %7 : vector<1x32x128xbf16> to vector<32x128xbf16>
    %cst_7 = arith.constant dense<0.000000e+00> : vector<256x128xf32>
    %9 = tpu.matmul %3, %8, %cst_7 {dimension_numbers = #tpu.dot_dimension_numbers<[1], [0], [0], [1], [0, 0, 1, 1], [], []>} : vector<256x32xbf16>, vector<32x128xbf16>, vector<256x128xf32> -> vector<256x128xf32>
    %10 = arith.mulf %6, %6 : vector<256x128xf32>
    %11 = arith.mulf %6, %10 : vector<256x128xf32>
    %cst_8 = arith.constant 4.471500e-02 : f32
    %12 = vector.broadcast %cst_8 : f32 to vector<256x128xf32>
    %13 = arith.mulf %12, %11 : vector<256x128xf32>
    %14 = arith.addf %6, %13 : vector<256x128xf32>
    %cst_9 = arith.constant 0.797884583 : f32
    %15 = vector.broadcast %cst_9 : f32 to vector<256x128xf32>
    %16 = arith.mulf %15, %14 : vector<256x128xf32>
    %17 = math.tanh %16 : vector<256x128xf32>
    %cst_10 = arith.constant 1.000000e+00 : f32
    %18 = vector.broadcast %cst_10 : f32 to vector<256x128xf32>
    %19 = arith.addf %18, %17 : vector<256x128xf32>
    %cst_11 = arith.constant 5.000000e-01 : f32
    %20 = vector.broadcast %cst_11 : f32 to vector<256x128xf32>
    %21 = arith.mulf %20, %19 : vector<256x128xf32>
    %22 = arith.mulf %6, %21 : vector<256x128xf32>
    %23 = arith.mulf %22, %9 : vector<256x128xf32>
    %24 = arith.truncf %23 : vector<256x128xf32> to vector<256x128xbf16>
    %c0_12 = arith.constant 0 : index
    %c0_13 = arith.constant 0 : index
    %25 = vector.load %arg6[%c0_12, %c0_13] : memref<256x32xf32, #tpu.memory_space<vmem>>, vector<256x32xf32>
    %c0_14 = arith.constant 0 : index
    %c0_15 = arith.constant 0 : index
    %26 = vector.load %arg4[%c0_14, %c0_15] : memref<128x32xbf16, #tpu.memory_space<vmem>>, vector<128x32xbf16>
    %cst_16 = arith.constant dense<0.000000e+00> : vector<256x32xf32>
    %27 = tpu.matmul %24, %26, %cst_16 {dimension_numbers = #tpu.dot_dimension_numbers<[1], [0], [0], [1], [0, 0, 1, 1], [], []>} : vector<256x128xbf16>, vector<128x32xbf16>, vector<256x32xf32> -> vector<256x32xf32>
    %28 = arith.addf %25, %27 : vector<256x32xf32>
    %c0_17 = arith.constant 0 : index
    %c0_18 = arith.constant 0 : index
    %29 = vector.load %arg6[%c0_17, %c0_18] : memref<256x32xf32, #tpu.memory_space<vmem>>, vector<256x32xf32>
    tpu.vector_store %arg6[%c0_17, %c0_18], %28 {strides = array<i32>} : memref<256x32xf32, #tpu.memory_space<vmem>>, vector<256x32xf32>,
    %c0_i32_19 = arith.constant 0 : i32
    %30 = arith.cmpi eq, %arg1, %c0_i32_19 : i32
    %31 = arith.extui %30 : i1 to i32
    %c0_i32_20 = arith.constant 0 : i32
    %32 = arith.cmpi ne, %31, %c0_i32_20 : i32
    scf.if %32 {
      %c0_21 = arith.constant 0 : index
      %c0_22 = arith.constant 0 : index
      %33 = vector.load %arg6[%c0_21, %c0_22] : memref<256x32xf32, #tpu.memory_space<vmem>>, vector<256x32xf32>
      %c0_23 = arith.constant 0 : index
      %c0_24 = arith.constant 0 : index
      %34 = vector.load %arg5[%c0_23, %c0_24] : memref<256x32xf32, #tpu.memory_space<vmem>>, vector<256x32xf32>
      tpu.vector_store %arg5[%c0_23, %c0_24], %33 {strides = array<i32>} : memref<256x32xf32, #tpu.memory_space<vmem>>, vector<256x32xf32>,
    } else {
    }
    return
  }
  func.func @transform_0(%arg0: i32, %arg1: i32) -> (i32, i32) {
    %c0_i32 = arith.constant 0 : i32
    %c0_i32_0 = arith.constant 0 : i32
    return %arg0, %c0_i32 : i32, i32
  }
  func.func @transform_1(%arg0: i32, %arg1: i32) -> (i32, i32, i32) {
    %c0_i32 = arith.constant 0 : i32
    %c0_i32_0 = arith.constant 0 : i32
    %c0_i32_1 = arith.constant 0 : i32
    return %c0_i32, %c0_i32_0, %arg1 : i32, i32, i32
  }
  func.func @transform_2(%arg0: i32, %arg1: i32) -> (i32, i32) {
    %c0_i32 = arith.constant 0 : i32
    %c0_i32_0 = arith.constant 0 : i32
    return %arg1, %c0_i32 : i32, i32
  }
  func.func @transform_3(%arg0: i32, %arg1: i32) -> (i32, i32) {
    %c0_i32 = arith.constant 0 : i32
    %c0_i32_0 = arith.constant 0 : i32
    return %arg0, %c0_i32 : i32, i32
  }
}

</mosaic_0001>

<llo_original>
// kernel: gemma_mlp.1
$region0: #{gemma_mlp.1}
  #allocation0 [shape = 'u32[]', space=smem, size = 0x4, offset = 0x4, fixed_abs, tag = 'smem constant byte address 0x4 - core index']
  #allocation1 [shape = 'u32[144,128]{1,0:T(1,128)}', space=vmem, size = 0x12000, scoped, tag = 'internal scratch']
  #allocation2 [shape = 'f32[256,32]{1,0:T(8,128)}', space=vmem, size = 0x20000, scoped, tag = 'scratch operand']
  %s0 = inlined_call_operand.vmem [shape: bf16[256,32], index: 0, kind: input, shape index: {}]
  %s1 = inlined_call_operand.vmem [shape: bf16[2,32,128], index: 1, kind: input, shape index: {}]
  %s2 = inlined_call_operand.vmem [shape: bf16[128,32], index: 2, kind: input, shape index: {}]
  %s3 = inlined_call_operand.vmem [shape: f32[256,32], index: 3, kind: output, shape index: {}]
  %s4 = sld [smem:[#allocation0]]
  $region30: #{gemma_mlp.1} parent=0
    _
  %s6 = ssub.s32 1, %s4
  %s7 = scalar_select 0, %s6, %s4
  // Predicated region
  $region2: #{gemma_mlp.1} parent=0 // pred_check
    _
  $region3: #{gemma_mlp.1} parent=0 // pred_check_branch
    %9 = sbr.rel (0) target = $region5
  $region4: #{gemma_mlp.1} parent=0 // pred_region
    _
  $region5: #{gemma_mlp.1} parent=0 // pred_fallthru
    _
  // Predicated region
  $region6: #{gemma_mlp.1} parent=0 // pred_check
    _
  $region7: #{gemma_mlp.1} parent=0 // pred_check_branch
    %11 = sbr.rel (0) target = $region9
  $region8: #{gemma_mlp.1} parent=0 // pred_region
    _
  $region9: #{gemma_mlp.1} parent=0 // pred_fallthru
    _
  // Predicated region
  $region10: #{gemma_mlp.1} parent=0 // pred_check
    _
  $region11: #{gemma_mlp.1} parent=0 // pred_check_branch
    %13 = sbr.rel (0) target = $region13
  $region12: #{gemma_mlp.1} parent=0 // pred_region
    _
  $region13: #{gemma_mlp.1} parent=0 // pred_fallthru
    _
  %p15 = scmp.eq.s32.totalorder 0, 0
  // Predicated region
  $region14: #{gemma_mlp.1} parent=0 // pred_check
    %p16 = pneg %p15
  $region15: #{gemma_mlp.1} parent=0 // pred_check_branch
    %18 = sbr.rel (%p16) target = $region17
  $region16: #{gemma_mlp.1} parent=0 // pred_region
    %vm19 = vcmask 261120
    %20 = vst.msk [vmem:[#allocation2] sm:$0xff] %vm19, 0.0
    %21 = vst.msk [vmem:[#allocation2 + $0x8] sm:$0xff] %vm19, 0.0
    %22 = vst.msk [vmem:[#allocation2 + $0x10] sm:$0xff] %vm19, 0.0
    %23 = vst.msk [vmem:[#allocation2 + $0x18] sm:$0xff] %vm19, 0.0
    %24 = vst.msk [vmem:[#allocation2 + $0x20] sm:$0xff] %vm19, 0.0
    %25 = vst.msk [vmem:[#allocation2 + $0x28] sm:$0xff] %vm19, 0.0
    %26 = vst.msk [vmem:[#allocation2 + $0x30] sm:$0xff] %vm19, 0.0
    %27 = vst.msk [vmem:[#allocation2 + $0x38] sm:$0xff] %vm19, 0.0
    %28 = vst.msk [vmem:[#allocation2 + $0x40] sm:$0xff] %vm19, 0.0
    %29 = vst.msk [vmem:[#allocation2 + $0x48] sm:$0xff] %vm19, 0.0
    %30 = vst.msk [vmem:[#allocation2 + $0x50] sm:$0xff] %vm19, 0.0
    %31 = vst.msk [vmem:[#allocation2 + $0x58] sm:$0xff] %vm19, 0.0
    %32 = vst.msk [vmem:[#allocation2 + $0x60] sm:$0xff] %vm19, 0.0
    %33 = vst.msk [vmem:[#allocation2 + $0x68] sm:$0xff] %vm19, 0.0
    %34 = vst.msk [vmem:[#allocation2 + $0x70] sm:$0xff] %vm19, 0.0
    %35 = vst.msk [vmem:[#allocation2 + $0x78] sm:$0xff] %vm19, 0.0
    %36 = vst.msk [vmem:[#allocation2 + $0x80] sm:$0xff] %vm19, 0.0
    %37 = vst.msk [vmem:[#allocation2 + $0x88] sm:$0xff] %vm19, 0.0
    %38 = vst.msk [vmem:[#allocation2 + $0x90] sm:$0xff] %vm19, 0.0
    %39 = vst.msk [vmem:[#allocation2 + $0x98] sm:$0xff] %vm19, 0.0
    %40 = vst.msk [vmem:[#allocation2 + $0xa0] sm:$0xff] %vm19, 0.0
    %41 = vst.msk [vmem:[#allocation2 + $0xa8] sm:$0xff] %vm19, 0.0
    %42 = vst.msk [vmem:[#allocation2 + $0xb0] sm:$0xff] %vm19, 0.0
    %43 = vst.msk [vmem:[#allocation2 + $0xb8] sm:$0xff] %vm19, 0.0
    %44 = vst.msk [vmem:[#allocation2 + $0xc0] sm:$0xff] %vm19, 0.0
    %45 = vst.msk [vmem:[#allocation2 + $0xc8] sm:$0xff] %vm19, 0.0
    %46 = vst.msk [vmem:[#allocation2 + $0xd0] sm:$0xff] %vm19, 0.0
    %47 = vst.msk [vmem:[#allocation2 + $0xd8] sm:$0xff] %vm19, 0.0
    %48 = vst.msk [vmem:[#allocation2 + $0xe0] sm:$0xff] %vm19, 0.0
    %49 = vst.msk [vmem:[#allocation2 + $0xe8] sm:$0xff] %vm19, 0.0
    %50 = vst.msk [vmem:[#allocation2 + $0xf0] sm:$0xff] %vm19, 0.0
    %51 = vst.msk [vmem:[#allocation2 + $0xf8] sm:$0xff] %vm19, 0.0
  $region17: #{gemma_mlp.1} parent=0 // pred_fallthru
    _
  %v52 = vld [vmem:[%s0] sm:$0xf]
  %v53 = vld [vmem:[%s0 + $0x4] sm:$0xf]
  %v54 = vld [vmem:[%s0 + $0x8] sm:$0xf]
  %v55 = vld [vmem:[%s0 + $0xc] sm:$0xf]
  %v56 = vld [vmem:[%s0 + $0x10] sm:$0xf]
  %v57 = vld [vmem:[%s0 + $0x14] sm:$0xf]
  %v58 = vld [vmem:[%s0 + $0x18] sm:$0xf]
  %v59 = vld [vmem:[%s0 + $0x1c] sm:$0xf]
  %v60 = vld [vmem:[%s0 + $0x20] sm:$0xf]
  %v61 = vld [vmem:[%s0 + $0x24] sm:$0xf]
  %v62 = vld [vmem:[%s0 + $0x28] sm:$0xf]
  %v63 = vld [vmem:[%s0 + $0x2c] sm:$0xf]
  %v64 = vld [vmem:[%s0 + $0x30] sm:$0xf]
  %v65 = vld [vmem:[%s0 + $0x34] sm:$0xf]
  %v66 = vld [vmem:[%s0 + $0x38] sm:$0xf]
  %v67 = vld [vmem:[%s0 + $0x3c] sm:$0xf]
  %v68 = vld [vmem:[%s0 + $0x40] sm:$0xf]
  %v69 = vld [vmem:[%s0 + $0x44] sm:$0xf]
  %v70 = vld [vmem:[%s0 + $0x48] sm:$0xf]
  %v71 = vld [vmem:[%s0 + $0x4c] sm:$0xf]
  %v72 = vld [vmem:[%s0 + $0x50] sm:$0xf]
  %v73 = vld [vmem:[%s0 + $0x54] sm:$0xf]
  %v74 = vld [vmem:[%s0 + $0x58] sm:$0xf]
  %v75 = vld [vmem:[%s0 + $0x5c] sm:$0xf]
  %v76 = vld [vmem:[%s0 + $0x60] sm:$0xf]
  %v77 = vld [vmem:[%s0 + $0x64] sm:$0xf]
  %v78 = vld [vmem:[%s0 + $0x68] sm:$0xf]
  %v79 = vld [vmem:[%s0 + $0x6c] sm:$0xf]
  %v80 = vld [vmem:[%s0 + $0x70] sm:$0xf]
  %v81 = vld [vmem:[%s0 + $0x74] sm:$0xf]
  %v82 = vld [vmem:[%s0 + $0x78] sm:$0xf]
  %v83 = vld [vmem:[%s0 + $0x7c] sm:$0xf]
  %v84 = vld [vmem:[%s1] sm:$0xf]
  %v85 = vld [vmem:[%s1 + $0x4] sm:$0xf]
  %v86 = vld [vmem:[%s1 + $0x8] sm:$0xf]
  %v87 = vld [vmem:[%s1 + $0xc] sm:$0xf]
  %v120 = vunpack.c.l.b16 %v52
  %v121 = vunpack.c.l.b16 %v53
  %v122 = vunpack.c.l.b16 %v54
  %v123 = vunpack.c.l.b16 %v55
  %v124 = vunpack.c.l.b16 %v56
  %v125 = vunpack.c.l.b16 %v57
  %v126 = vunpack.c.l.b16 %v58
  %v127 = vunpack.c.l.b16 %v59
  %v128 = vunpack.c.l.b16 %v60
  %v129 = vunpack.c.l.b16 %v61
  %v130 = vunpack.c.l.b16 %v62
  %v131 = vunpack.c.l.b16 %v63
  %v132 = vunpack.c.l.b16 %v64
  %v133 = vunpack.c.l.b16 %v65
  %v134 = vunpack.c.l.b16 %v66
  %v135 = vunpack.c.l.b16 %v67
  %v136 = vunpack.c.l.b16 %v68
  %v137 = vunpack.c.l.b16 %v69
  %v138 = vunpack.c.l.b16 %v70
  %v139 = vunpack.c.l.b16 %v71
  %v140 = vunpack.c.l.b16 %v72
  %v141 = vunpack.c.l.b16 %v73
  %v142 = vunpack.c.l.b16 %v74
  %v143 = vunpack.c.l.b16 %v75
  %v144 = vunpack.c.l.b16 %v76
  %v145 = vunpack.c.l.b16 %v77
  %v146 = vunpack.c.l.b16 %v78
  %v147 = vunpack.c.l.b16 %v79
  %v148 = vunpack.c.l.b16 %v80
  %v149 = vunpack.c.l.b16 %v81
  %v150 = vunpack.c.l.b16 %v82
  %v151 = vunpack.c.l.b16 %v83
  %v152 = vpack.c.b16 %v121, %v120
  %v153 = vpack.c.b16 %v123, %v122
  %v154 = vpack.c.b16 %v125, %v124
  %v155 = vpack.c.b16 %v127, %v126
  %v156 = vpack.c.b16 %v129, %v128
  %v157 = vpack.c.b16 %v131, %v130
  %v158 = vpack.c.b16 %v133, %v132
  %v159 = vpack.c.b16 %v135, %v134
  %v160 = vpack.c.b16 %v137, %v136
  %v161 = vpack.c.b16 %v139, %v138
  %v162 = vpack.c.b16 %v141, %v140
  %v163 = vpack.c.b16 %v143, %v142
  %v164 = vpack.c.b16 %v145, %v144
  %v165 = vpack.c.b16 %v147, %v146
  %v166 = vpack.c.b16 %v149, %v148
  %v167 = vpack.c.b16 %v151, %v150
  %v172 = vunpack.c.l.b16 %v84
  %v173 = vunpack.c.l.b16 %v85
  %v174 = vunpack.c.l.b16 %v86
  %v175 = vunpack.c.l.b16 %v87
  %v176 = vpack.c.b16 %v173, %v172
  %v177 = vpack.c.b16 %v175, %v174
  %vm180 = vcmask 261120
  %v182 = vsel %vm180, %v152, 0
  %v185 = vsel %vm180, %v153, 0
  %v188 = vsel %vm180, %v154, 0
  %v191 = vsel %vm180, %v155, 0
  %v194 = vsel %vm180, %v156, 0
  %v197 = vsel %vm180, %v157, 0
  %v200 = vsel %vm180, %v158, 0
  %v203 = vsel %vm180, %v159, 0
  %v206 = vsel %vm180, %v160, 0
  %v209 = vsel %vm180, %v161, 0
  %v212 = vsel %vm180, %v162, 0
  %v215 = vsel %vm180, %v163, 0
  %v218 = vsel %vm180, %v164, 0
  %v221 = vsel %vm180, %v165, 0
  %v224 = vsel %vm180, %v166, 0
  %v227 = vsel %vm180, %v167, 0
  %229 = vmatprep.subr.bf16.mxu0 0
  %230 = vmatpush1.bf16.msra.mxu0 %v176
  %231 = vmatprep.subr.bf16.mxu0 0
  %232 = vmatpush1.bf16.msra.mxu0 %v177
  %233 = vmatprep.subr.bf16.mxu0 0
  %234 = vmatpush1.bf16.msra.mxu0 0
  %235 = vmatprep.subr.bf16.mxu0 0
  %236 = vmatpush1.bf16.msra.mxu0 0
  %237 = vmatprep.subr.bf16.mxu0 0
  %238 = vmatpush1.bf16.msra.mxu0 0
  %239 = vmatprep.subr.bf16.mxu0 0
  %240 = vmatpush1.bf16.msra.mxu0 0
  %241 = vmatprep.subr.bf16.mxu0 0
  %242 = vmatpush1.bf16.msra.mxu0 0
  %243 = vmatprep.subr.bf16.mxu0 0
  %244 = vmatpush1.bf16.msra.mxu0 0
  %245 = vmatprep.subr.bf16.mxu0 0
  %246 = vmatpush1.bf16.msra.mxu0 0
  %247 = vmatprep.subr.bf16.mxu0 0
  %248 = vmatpush1.bf16.msra.mxu0 0
  %249 = vmatprep.subr.bf16.mxu0 0
  %250 = vmatpush1.bf16.msra.mxu0 0
  %251 = vmatprep.subr.bf16.mxu0 0
  %252 = vmatpush1.bf16.msra.mxu0 0
  %253 = vmatprep.subr.bf16.mxu0 0
  %254 = vmatpush1.bf16.msra.mxu0 0
  %255 = vmatprep.subr.bf16.mxu0 0
  %256 = vmatpush1.bf16.msra.mxu0 0
  %257 = vmatprep.subr.bf16.mxu0 0
  %258 = vmatpush1.bf16.msra.mxu0 0
  %259 = vmatprep.subr.bf16.mxu0 0
  %260 = vmatpush1.bf16.msra.mxu0 0
  %261 = vmatprep.mubr.bf16.mxu0 0
  %262 = vmatmul.mubr.bf16.gmra.mrb[0].mxu0 %v182
  %v263 = vpop.f32.mrb[0].mxu0
  %v264 = vadd.f32 0.0, %v263
  %v265 = vpop.f32.mrb[0].mxu0
  %v266 = vpop.f32.mrb[0].mxu0
  %v267 = vadd.f32 0.0, %v266
  %v268 = vpop.f32.mrb[0].mxu0
  %269 = vmatprep.mubr.bf16.mxu0 0
  %270 = vmatmul.mubr.bf16.gmra.mrb[0].mxu0 %v185
  %v271 = vpop.f32.mrb[0].mxu0
  %v272 = vadd.f32 0.0, %v271
  %v273 = vpop.f32.mrb[0].mxu0
  %v274 = vpop.f32.mrb[0].mxu0
  %v275 = vadd.f32 0.0, %v274
  %v276 = vpop.f32.mrb[0].mxu0
  %277 = vmatprep.mubr.bf16.mxu0 0
  %278 = vmatmul.mubr.bf16.gmra.mrb[0].mxu0 %v188
  %v279 = vpop.f32.mrb[0].mxu0
  %v280 = vadd.f32 0.0, %v279
  %v281 = vpop.f32.mrb[0].mxu0
  %v282 = vpop.f32.mrb[0].mxu0
  %v283 = vadd.f32 0.0, %v282
  %v284 = vpop.f32.mrb[0].mxu0
  %285 = vmatprep.mubr.bf16.mxu0 0
  %286 = vmatmul.mubr.bf16.gmra.mrb[0].mxu0 %v191
  %v287 = vpop.f32.mrb[0].mxu0
  %v288 = vadd.f32 0.0, %v287
  %v289 = vpop.f32.mrb[0].mxu0
  %v290 = vpop.f32.mrb[0].mxu0
  %v291 = vadd.f32 0.0, %v290
  %v292 = vpop.f32.mrb[0].mxu0
  %293 = vmatprep.mubr.bf16.mxu0 0
  %294 = vmatmul.mubr.bf16.gmra.mrb[0].mxu0 %v194
  %v295 = vpop.f32.mrb[0].mxu0
  %v296 = vadd.f32 0.0, %v295
  %v297 = vpop.f32.mrb[0].mxu0
  %v298 = vpop.f32.mrb[0].mxu0
  %v299 = vadd.f32 0.0, %v298
  %v300 = vpop.f32.mrb[0].mxu0
  %301 = vmatprep.mubr.bf16.mxu0 0
  %302 = vmatmul.mubr.bf16.gmra.mrb[0].mxu0 %v197
  %v303 = vpop.f32.mrb[0].mxu0
  %v304 = vadd.f32 0.0, %v303
  %v305 = vpop.f32.mrb[0].mxu0
  %v306 = vpop.f32.mrb[0].mxu0
  %v307 = vadd.f32 0.0, %v306
  %v308 = vpop.f32.mrb[0].mxu0
  %309 = vmatprep.mubr.bf16.mxu0 0
  %310 = vmatmul.mubr.bf16.gmra.mrb[0].mxu0 %v200
  %v311 = vpop.f32.mrb[0].mxu0
  %v312 = vadd.f32 0.0, %v311
  %v313 = vpop.f32.mrb[0].mxu0
  %v314 = vpop.f32.mrb[0].mxu0
  %v315 = vadd.f32 0.0, %v314
  %v316 = vpop.f32.mrb[0].mxu0
  %317 = vmatprep.mubr.bf16.mxu0 0
  %318 = vmatmul.mubr.bf16.gmra.mrb[0].mxu0 %v203
  %v319 = vpop.f32.mrb[0].mxu0
  %v320 = vadd.f32 0.0, %v319
  %v321 = vpop.f32.mrb[0].mxu0
  %v322 = vpop.f32.mrb[0].mxu0
  %v323 = vadd.f32 0.0, %v322
  %v324 = vpop.f32.mrb[0].mxu0
  %325 = vmatprep.mubr.bf16.mxu0 0
  %326 = vmatmul.mubr.bf16.gmra.mrb[0].mxu0 %v206
  %v327 = vpop.f32.mrb[0].mxu0
  %v328 = vadd.f32 0.0, %v327
  %v329 = vpop.f32.mrb[0].mxu0
  %v330 = vpop.f32.mrb[0].mxu0
  %v331 = vadd.f32 0.0, %v330
  %v332 = vpop.f32.mrb[0].mxu0
  %333 = vmatprep.mubr.bf16.mxu0 0
  %334 = vmatmul.mubr.bf16.gmra.mrb[0].mxu0 %v209
  %v335 = vpop.f32.mrb[0].mxu0
  %v336 = vadd.f32 0.0, %v335
  %v337 = vpop.f32.mrb[0].mxu0
  %v338 = vpop.f32.mrb[0].mxu0
  %v339 = vadd.f32 0.0, %v338
  %v340 = vpop.f32.mrb[0].mxu0
  %341 = vmatprep.mubr.bf16.mxu0 0
  %342 = vmatmul.mubr.bf16.gmra.mrb[0].mxu0 %v212
  %v343 = vpop.f32.mrb[0].mxu0
  %v344 = vadd.f32 0.0, %v343
  %v345 = vpop.f32.mrb[0].mxu0
  %v346 = vpop.f32.mrb[0].mxu0
  %v347 = vadd.f32 0.0, %v346
  %v348 = vpop.f32.mrb[0].mxu0
  %349 = vmatprep.mubr.bf16.mxu0 0
  %350 = vmatmul.mubr.bf16.gmra.mrb[0].mxu0 %v215
  %v351 = vpop.f32.mrb[0].mxu0
  %v352 = vadd.f32 0.0, %v351
  %v353 = vpop.f32.mrb[0].mxu0
  %v354 = vpop.f32.mrb[0].mxu0
  %v355 = vadd.f32 0.0, %v354
  %v356 = vpop.f32.mrb[0].mxu0
  %357 = vmatprep.mubr.bf16.mxu0 0
  %358 = vmatmul.mubr.bf16.gmra.mrb[0].mxu0 %v218
  %v359 = vpop.f32.mrb[0].mxu0
  %v360 = vadd.f32 0.0, %v359
  %v361 = vpop.f32.mrb[0].mxu0
  %v362 = vpop.f32.mrb[0].mxu0
  %v363 = vadd.f32 0.0, %v362
  %v364 = vpop.f32.mrb[0].mxu0
  %365 = vmatprep.mubr.bf16.mxu0 0
  %366 = vmatmul.mubr.bf16.gmra.mrb[0].mxu0 %v221
  %v367 = vpop.f32.mrb[0].mxu0
  %v368 = vadd.f32 0.0, %v367
  %v369 = vpop.f32.mrb[0].mxu0
  %v370 = vpop.f32.mrb[0].mxu0
  %v371 = vadd.f32 0.0, %v370
  %v372 = vpop.f32.mrb[0].mxu0
  %373 = vmatprep.mubr.bf16.mxu0 0
  %374 = vmatmul.mubr.bf16.gmra.mrb[0].mxu0 %v224
  %v375 = vpop.f32.mrb[0].mxu0
  %v376 = vadd.f32 0.0, %v375
  %v377 = vpop.f32.mrb[0].mxu0
  %v378 = vpop.f32.mrb[0].mxu0
  %v379 = vadd.f32 0.0, %v378
  %v380 = vpop.f32.mrb[0].mxu0
  %381 = vmatprep.mubr.bf16.mxu0 0
  %382 = vmatmul.mubr.bf16.gmra.mrb[0].mxu0 %v227
  %v383 = vpop.f32.mrb[0].mxu0
  %v384 = vadd.f32 0.0, %v383
  %v385 = vpop.f32.mrb[0].mxu0
  %v386 = vpop.f32.mrb[0].mxu0
  %v387 = vadd.f32 0.0, %v386
  %v388 = vpop.f32.mrb[0].mxu0
  %389 = vdwg.mxu0
  %s390 = scalar_lea.vmem %s1, 16
  %v391 = vld [vmem:[%s390] sm:$0xf]
  %v392 = vld [vmem:[%s390 + $0x4] sm:$0xf]
  %v393 = vld [vmem:[%s390 + $0x8] sm:$0xf]
  %v394 = vld [vmem:[%s390 + $0xc] sm:$0xf]
  %v399 = vunpack.c.l.b16 %v391
  %v400 = vunpack.c.l.b16 %v392
  %v401 = vunpack.c.l.b16 %v393
  %v402 = vunpack.c.l.b16 %v394
  %v403 = vpack.c.b16 %v400, %v399
  %v404 = vpack.c.b16 %v402, %v401
  %407 = vmatprep.subr.bf16.mxu0 0
  %408 = vmatpush1.bf16.msra.mxu0 %v403
  %409 = vmatprep.subr.bf16.mxu0 0
  %410 = vmatpush1.bf16.msra.mxu0 %v404
  %411 = vmatprep.subr.bf16.mxu0 0
  %412 = vmatpush1.bf16.msra.mxu0 0
  %413 = vmatprep.subr.bf16.mxu0 0
  %414 = vmatpush1.bf16.msra.mxu0 0
  %415 = vmatprep.subr.bf16.mxu0 0
  %416 = vmatpush1.bf16.msra.mxu0 0
  %417 = vmatprep.subr.bf16.mxu0 0
  %418 = vmatpush1.bf16.msra.mxu0 0
  %419 = vmatprep.subr.bf16.mxu0 0
  %420 = vmatpush1.bf16.msra.mxu0 0
  %421 = vmatprep.subr.bf16.mxu0 0
  %422 = vmatpush1.bf16.msra.mxu0 0
  %423 = vmatprep.subr.bf16.mxu0 0
  %424 = vmatpush1.bf16.msra.mxu0 0
  %425 = vmatprep.subr.bf16.mxu0 0
  %426 = vmatpush1.bf16.msra.mxu0 0
  %427 = vmatprep.subr.bf16.mxu0 0
  %428 = vmatpush1.bf16.msra.mxu0 0
  %429 = vmatprep.subr.bf16.mxu0 0
  %430 = vmatpush1.bf16.msra.mxu0 0
  %431 = vmatprep.subr.bf16.mxu0 0
  %432 = vmatpush1.bf16.msra.mxu0 0
  %433 = vmatprep.subr.bf16.mxu0 0
  %434 = vmatpush1.bf16.msra.mxu0 0
  %435 = vmatprep.subr.bf16.mxu0 0
  %436 = vmatpush1.bf16.msra.mxu0 0
  %437 = vmatprep.subr.bf16.mxu0 0
  %438 = vmatpush1.bf16.msra.mxu0 0
  %439 = vmatprep.mubr.bf16.mxu0 0
  %440 = vmatmul.mubr.bf16.gmra.mrb[0].mxu0 %v182
  %v441 = vpop.f32.mrb[0].mxu0
  %v442 = vadd.f32 0.0, %v441
  %v443 = vpop.f32.mrb[0].mxu0
  %v444 = vpop.f32.mrb[0].mxu0
  %v445 = vadd.f32 0.0, %v444
  %v446 = vpop.f32.mrb[0].mxu0
  %447 = vmatprep.mubr.bf16.mxu0 0
  %448 = vmatmul.mubr.bf16.gmra.mrb[0].mxu0 %v185
  %v449 = vpop.f32.mrb[0].mxu0
  %v450 = vadd.f32 0.0, %v449
  %v451 = vpop.f32.mrb[0].mxu0
  %v452 = vpop.f32.mrb[0].mxu0
  %v453 = vadd.f32 0.0, %v452
  %v454 = vpop.f32.mrb[0].mxu0
  %455 = vmatprep.mubr.bf16.mxu0 0
  %456 = vmatmul.mubr.bf16.gmra.mrb[0].mxu0 %v188
  %v457 = vpop.f32.mrb[0].mxu0
  %v458 = vadd.f32 0.0, %v457
  %v459 = vpop.f32.mrb[0].mxu0
  %v460 = vpop.f32.mrb[0].mxu0
  %v461 = vadd.f32 0.0, %v460
  %v462 = vpop.f32.mrb[0].mxu0
  %463 = vmatprep.mubr.bf16.mxu0 0
  %464 = vmatmul.mubr.bf16.gmra.mrb[0].mxu0 %v191
  %v465 = vpop.f32.mrb[0].mxu0
  %v466 = vadd.f32 0.0, %v465
  %v467 = vpop.f32.mrb[0].mxu0
  %v468 = vpop.f32.mrb[0].mxu0
  %v469 = vadd.f32 0.0, %v468
  %v470 = vpop.f32.mrb[0].mxu0
  %471 = vmatprep.mubr.bf16.mxu0 0
  %472 = vmatmul.mubr.bf16.gmra.mrb[0].mxu0 %v194
  %v473 = vpop.f32.mrb[0].mxu0
  %v474 = vadd.f32 0.0, %v473
  %v475 = vpop.f32.mrb[0].mxu0
  %v476 = vpop.f32.mrb[0].mxu0
  %v477 = vadd.f32 0.0, %v476
  %v478 = vpop.f32.mrb[0].mxu0
  %479 = vmatprep.mubr.bf16.mxu0 0
  %480 = vmatmul.mubr.bf16.gmra.mrb[0].mxu0 %v197
  %v481 = vpop.f32.mrb[0].mxu0
  %v482 = vadd.f32 0.0, %v481
  %v483 = vpop.f32.mrb[0].mxu0
  %v484 = vpop.f32.mrb[0].mxu0
  %v485 = vadd.f32 0.0, %v484
  %v486 = vpop.f32.mrb[0].mxu0
  %487 = vmatprep.mubr.bf16.mxu0 0
  %488 = vmatmul.mubr.bf16.gmra.mrb[0].mxu0 %v200
  %v489 = vpop.f32.mrb[0].mxu0
  %v490 = vadd.f32 0.0, %v489
  %v491 = vpop.f32.mrb[0].mxu0
  %v492 = vpop.f32.mrb[0].mxu0
  %v493 = vadd.f32 0.0, %v492
  %v494 = vpop.f32.mrb[0].mxu0
  %495 = vmatprep.mubr.bf16.mxu0 0
  %496 = vmatmul.mubr.bf16.gmra.mrb[0].mxu0 %v203
  %v497 = vpop.f32.mrb[0].mxu0
  %v498 = vadd.f32 0.0, %v497
  %v499 = vpop.f32.mrb[0].mxu0
  %v500 = vpop.f32.mrb[0].mxu0
  %v501 = vadd.f32 0.0, %v500
  %v502 = vpop.f32.mrb[0].mxu0
  %503 = vmatprep.mubr.bf16.mxu0 0
  %504 = vmatmul.mubr.bf16.gmra.mrb[0].mxu0 %v206
  %v505 = vpop.f32.mrb[0].mxu0
  %v506 = vadd.f32 0.0, %v505
  %v507 = vpop.f32.mrb[0].mxu0
  %v508 = vpop.f32.mrb[0].mxu0
  %v509 = vadd.f32 0.0, %v508
  %v510 = vpop.f32.mrb[0].mxu0
  %511 = vmatprep.mubr.bf16.mxu0 0
  %512 = vmatmul.mubr.bf16.gmra.mrb[0].mxu0 %v209
  %v513 = vpop.f32.mrb[0].mxu0
  %v514 = vadd.f32 0.0, %v513
  %v515 = vpop.f32.mrb[0].mxu0
  %v516 = vpop.f32.mrb[0].mxu0
  %v517 = vadd.f32 0.0, %v516
  %v518 = vpop.f32.mrb[0].mxu0
  %519 = vmatprep.mubr.bf16.mxu0 0
  %520 = vmatmul.mubr.bf16.gmra.mrb[0].mxu0 %v212
  %v521 = vpop.f32.mrb[0].mxu0
  %v522 = vadd.f32 0.0, %v521
  %v523 = vpop.f32.mrb[0].mxu0
  %v524 = vpop.f32.mrb[0].mxu0
  %v525 = vadd.f32 0.0, %v524
  %v526 = vpop.f32.mrb[0].mxu0
  %527 = vmatprep.mubr.bf16.mxu0 0
  %528 = vmatmul.mubr.bf16.gmra.mrb[0].mxu0 %v215
  %v529 = vpop.f32.mrb[0].mxu0
  %v530 = vadd.f32 0.0, %v529
  %v531 = vpop.f32.mrb[0].mxu0
  %v532 = vpop.f32.mrb[0].mxu0
  %v533 = vadd.f32 0.0, %v532
  %v534 = vpop.f32.mrb[0].mxu0
  %535 = vmatprep.mubr.bf16.mxu0 0
  %536 = vmatmul.mubr.bf16.gmra.mrb[0].mxu0 %v218
  %v537 = vpop.f32.mrb[0].mxu0
  %v538 = vadd.f32 0.0, %v537
  %v539 = vpop.f32.mrb[0].mxu0
  %v540 = vpop.f32.mrb[0].mxu0
  %v541 = vadd.f32 0.0, %v540
  %v542 = vpop.f32.mrb[0].mxu0
  %543 = vmatprep.mubr.bf16.mxu0 0
  %544 = vmatmul.mubr.bf16.gmra.mrb[0].mxu0 %v221
  %v545 = vpop.f32.mrb[0].mxu0
  %v546 = vadd.f32 0.0, %v545
  %v547 = vpop.f32.mrb[0].mxu0
  %v548 = vpop.f32.mrb[0].mxu0
  %v549 = vadd.f32 0.0, %v548
  %v550 = vpop.f32.mrb[0].mxu0
  %551 = vmatprep.mubr.bf16.mxu0 0
  %552 = vmatmul.mubr.bf16.gmra.mrb[0].mxu0 %v224
  %v553 = vpop.f32.mrb[0].mxu0
  %v554 = vadd.f32 0.0, %v553
  %v555 = vpop.f32.mrb[0].mxu0
  %v556 = vpop.f32.mrb[0].mxu0
  %v557 = vadd.f32 0.0, %v556
  %v558 = vpop.f32.mrb[0].mxu0
  %559 = vmatprep.mubr.bf16.mxu0 0
  %560 = vmatmul.mubr.bf16.gmra.mrb[0].mxu0 %v227
  %v561 = vpop.f32.mrb[0].mxu0
  %v562 = vadd.f32 0.0, %v561
  %v563 = vpop.f32.mrb[0].mxu0
  %v564 = vpop.f32.mrb[0].mxu0
  %v565 = vadd.f32 0.0, %v564
  %v566 = vpop.f32.mrb[0].mxu0
  %567 = vdwg.mxu0
  %v568 = vmul.f32 %v264, %v264
  %v569 = vmul.f32 %v267, %v267
  %v570 = vmul.f32 %v272, %v272
  %v571 = vmul.f32 %v275, %v275
  %v572 = vmul.f32 %v280, %v280
  %v573 = vmul.f32 %v283, %v283
  %v574 = vmul.f32 %v288, %v288
  %v575 = vmul.f32 %v291, %v291
  %v576 = vmul.f32 %v296, %v296
  %v577 = vmul.f32 %v299, %v299
  %v578 = vmul.f32 %v304, %v304
  %v579 = vmul.f32 %v307, %v307
  %v580 = vmul.f32 %v312, %v312
  %v581 = vmul.f32 %v315, %v315
  %v582 = vmul.f32 %v320, %v320
  %v583 = vmul.f32 %v323, %v323
  %v584 = vmul.f32 %v328, %v328
  %v585 = vmul.f32 %v331, %v331
  %v586 = vmul.f32 %v336, %v336
  %v587 = vmul.f32 %v339, %v339
  %v588 = vmul.f32 %v344, %v344
  %v589 = vmul.f32 %v347, %v347
  %v590 = vmul.f32 %v352, %v352
  %v591 = vmul.f32 %v355, %v355
  %v592 = vmul.f32 %v360, %v360
  %v593 = vmul.f32 %v363, %v363
  %v594 = vmul.f32 %v368, %v368
  %v595 = vmul.f32 %v371, %v371
  %v596 = vmul.f32 %v376, %v376
  %v597 = vmul.f32 %v379, %v379
  %v598 = vmul.f32 %v384, %v384
  %v599 = vmul.f32 %v387, %v387
  %v600 = vmul.f32 %v264, %v568
  %v601 = vmul.f32 %v267, %v569
  %v602 = vmul.f32 %v272, %v570
  %v603 = vmul.f32 %v275, %v571
  %v604 = vmul.f32 %v280, %v572
  %v605 = vmul.f32 %v283, %v573
  %v606 = vmul.f32 %v288, %v574
  %v607 = vmul.f32 %v291, %v575
  %v608 = vmul.f32 %v296, %v576
  %v609 = vmul.f32 %v299, %v577
  %v610 = vmul.f32 %v304, %v578
  %v611 = vmul.f32 %v307, %v579
  %v612 = vmul.f32 %v312, %v580
  %v613 = vmul.f32 %v315, %v581
  %v614 = vmul.f32 %v320, %v582
  %v615 = vmul.f32 %v323, %v583
  %v616 = vmul.f32 %v328, %v584
  %v617 = vmul.f32 %v331, %v585
  %v618 = vmul.f32 %v336, %v586
  %v619 = vmul.f32 %v339, %v587
  %v620 = vmul.f32 %v344, %v588
  %v621 = vmul.f32 %v347, %v589
  %v622 = vmul.f32 %v352, %v590
  %v623 = vmul.f32 %v355, %v591
  %v624 = vmul.f32 %v360, %v592
  %v625 = vmul.f32 %v363, %v593
  %v626 = vmul.f32 %v368, %v594
  %v627 = vmul.f32 %v371, %v595
  %v628 = vmul.f32 %v376, %v596
  %v629 = vmul.f32 %v379, %v597
  %v630 = vmul.f32 %v384, %v598
  %v631 = vmul.f32 %v387, %v599
  %v632 = vmul.f32 %v600, 0.044715
  %v633 = vmul.f32 %v601, 0.044715
  %v634 = vmul.f32 %v602, 0.044715
  %v635 = vmul.f32 %v603, 0.044715
  %v636 = vmul.f32 %v604, 0.044715
  %v637 = vmul.f32 %v605, 0.044715
  %v638 = vmul.f32 %v606, 0.044715
  %v639 = vmul.f32 %v607, 0.044715
  %v640 = vmul.f32 %v608, 0.044715
  %v641 = vmul.f32 %v609, 0.044715
  %v642 = vmul.f32 %v610, 0.044715
  %v643 = vmul.f32 %v611, 0.044715
  %v644 = vmul.f32 %v612, 0.044715
  %v645 = vmul.f32 %v613, 0.044715
  %v646 = vmul.f32 %v614, 0.044715
  %v647 = vmul.f32 %v615, 0.044715
  %v648 = vmul.f32 %v616, 0.044715
  %v649 = vmul.f32 %v617, 0.044715
  %v650 = vmul.f32 %v618, 0.044715
  %v651 = vmul.f32 %v619, 0.044715
  %v652 = vmul.f32 %v620, 0.044715
  %v653 = vmul.f32 %v621, 0.044715
  %v654 = vmul.f32 %v622, 0.044715
  %v655 = vmul.f32 %v623, 0.044715
  %v656 = vmul.f32 %v624, 0.044715
  %v657 = vmul.f32 %v625, 0.044715
  %v658 = vmul.f32 %v626, 0.044715
  %v659 = vmul.f32 %v627, 0.044715
  %v660 = vmul.f32 %v628, 0.044715
  %v661 = vmul.f32 %v629, 0.044715
  %v662 = vmul.f32 %v630, 0.044715
  %v663 = vmul.f32 %v631, 0.044715
  %v664 = vadd.f32 %v264, %v632
  %v665 = vadd.f32 %v267, %v633
  %v666 = vadd.f32 %v272, %v634
  %v667 = vadd.f32 %v275, %v635
  %v668 = vadd.f32 %v280, %v636
  %v669 = vadd.f32 %v283, %v637
  %v670 = vadd.f32 %v288, %v638
  %v671 = vadd.f32 %v291, %v639
  %v672 = vadd.f32 %v296, %v640
  %v673 = vadd.f32 %v299, %v641
  %v674 = vadd.f32 %v304, %v642
  %v675 = vadd.f32 %v307, %v643
  %v676 = vadd.f32 %v312, %v644
  %v677 = vadd.f32 %v315, %v645
  %v678 = vadd.f32 %v320, %v646
  %v679 = vadd.f32 %v323, %v647
  %v680 = vadd.f32 %v328, %v648
  %v681 = vadd.f32 %v331, %v649
  %v682 = vadd.f32 %v336, %v650
  %v683 = vadd.f32 %v339, %v651
  %v684 = vadd.f32 %v344, %v652
  %v685 = vadd.f32 %v347, %v653
  %v686 = vadd.f32 %v352, %v654
  %v687 = vadd.f32 %v355, %v655
  %v688 = vadd.f32 %v360, %v656
  %v689 = vadd.f32 %v363, %v657
  %v690 = vadd.f32 %v368, %v658
  %v691 = vadd.f32 %v371, %v659
  %v692 = vadd.f32 %v376, %v660
  %v693 = vadd.f32 %v379, %v661
  %v694 = vadd.f32 %v384, %v662
  %v695 = vadd.f32 %v387, %v663
  %v696 = vmul.f32 %v664, 0.7978846
  %v697 = vmul.f32 %v665, 0.7978846
  %v698 = vmul.f32 %v666, 0.7978846
  %v699 = vmul.f32 %v667, 0.7978846
  %v700 = vmul.f32 %v668, 0.7978846
  %v701 = vmul.f32 %v669, 0.7978846
  %v702 = vmul.f32 %v670, 0.7978846
  %v703 = vmul.f32 %v671, 0.7978846
  %v704 = vmul.f32 %v672, 0.7978846
  %v705 = vmul.f32 %v673, 0.7978846
  %v706 = vmul.f32 %v674, 0.7978846
  %v707 = vmul.f32 %v675, 0.7978846
  %v708 = vmul.f32 %v676, 0.7978846
  %v709 = vmul.f32 %v677, 0.7978846
  %v710 = vmul.f32 %v678, 0.7978846
  %v711 = vmul.f32 %v679, 0.7978846
  %v712 = vmul.f32 %v680, 0.7978846
  %v713 = vmul.f32 %v681, 0.7978846
  %v714 = vmul.f32 %v682, 0.7978846
  %v715 = vmul.f32 %v683, 0.7978846
  %v716 = vmul.f32 %v684, 0.7978846
  %v717 = vmul.f32 %v685, 0.7978846
  %v718 = vmul.f32 %v686, 0.7978846
  %v719 = vmul.f32 %v687, 0.7978846
  %v720 = vmul.f32 %v688, 0.7978846
  %v721 = vmul.f32 %v689, 0.7978846
  %v722 = vmul.f32 %v690, 0.7978846
  %v723 = vmul.f32 %v691, 0.7978846
  %v724 = vmul.f32 %v692, 0.7978846
  %v725 = vmul.f32 %v693, 0.7978846
  %v726 = vmul.f32 %v694, 0.7978846
  %v727 = vmul.f32 %v695, 0.7978846
  %v728 = vtanh.pop %v696
  %v729 = vtanh.pop %v697
  %v730 = vtanh.pop %v698
  %v731 = vtanh.pop %v699
  %v732 = vtanh.pop %v700
  %v733 = vtanh.pop %v701
  %v734 = vtanh.pop %v702
  %v735 = vtanh.pop %v703
  %v736 = vtanh.pop %v704
  %v737 = vtanh.pop %v705
  %v738 = vtanh.pop %v706
  %v739 = vtanh.pop %v707
  %v740 = vtanh.pop %v708
  %v741 = vtanh.pop %v709
  %v742 = vtanh.pop %v710
  %v743 = vtanh.pop %v711
  %v744 = vtanh.pop %v712
  %v745 = vtanh.pop %v713
  %v746 = vtanh.pop %v714
  %v747 = vtanh.pop %v715
  %v748 = vtanh.pop %v716
  %v749 = vtanh.pop %v717
  %v750 = vtanh.pop %v718
  %v751 = vtanh.pop %v719
  %v752 = vtanh.pop %v720
  %v753 = vtanh.pop %v721
  %v754 = vtanh.pop %v722
  %v755 = vtanh.pop %v723
  %v756 = vtanh.pop %v724
  %v757 = vtanh.pop %v725
  %v758 = vtanh.pop %v726
  %v759 = vtanh.pop %v727
  %v760 = vadd.f32 %v728, 1.0
  %v761 = vadd.f32 %v729, 1.0
  %v762 = vadd.f32 %v730, 1.0
  %v763 = vadd.f32 %v731, 1.0
  %v764 = vadd.f32 %v732, 1.0
  %v765 = vadd.f32 %v733, 1.0
  %v766 = vadd.f32 %v734, 1.0
  %v767 = vadd.f32 %v735, 1.0
  %v768 = vadd.f32 %v736, 1.0
  %v769 = vadd.f32 %v737, 1.0
  %v770 = vadd.f32 %v738, 1.0
  %v771 = vadd.f32 %v739, 1.0
  %v772 = vadd.f32 %v740, 1.0
  %v773 = vadd.f32 %v741, 1.0
  %v774 = vadd.f32 %v742, 1.0
  %v775 = vadd.f32 %v743, 1.0
  %v776 = vadd.f32 %v744, 1.0
  %v777 = vadd.f32 %v745, 1.0
  %v778 = vadd.f32 %v746, 1.0
  %v779 = vadd.f32 %v747, 1.0
  %v780 = vadd.f32 %v748, 1.0
  %v781 = vadd.f32 %v749, 1.0
  %v782 = vadd.f32 %v750, 1.0
  %v783 = vadd.f32 %v751, 1.0
  %v784 = vadd.f32 %v752, 1.0
  %v785 = vadd.f32 %v753, 1.0
  %v786 = vadd.f32 %v754, 1.0
  %v787 = vadd.f32 %v755, 1.0
  %v788 = vadd.f32 %v756, 1.0
  %v789 = vadd.f32 %v757, 1.0
  %v790 = vadd.f32 %v758, 1.0
  %v791 = vadd.f32 %v759, 1.0
  %v792 = vmul.f32 %v760, 0.5
  %v793 = vmul.f32 %v761, 0.5
  %v794 = vmul.f32 %v762, 0.5
  %v795 = vmul.f32 %v763, 0.5
  %v796 = vmul.f32 %v764, 0.5
  %v797 = vmul.f32 %v765, 0.5
  %v798 = vmul.f32 %v766, 0.5
  %v799 = vmul.f32 %v767, 0.5
  %v800 = vmul.f32 %v768, 0.5
  %v801 = vmul.f32 %v769, 0.5
  %v802 = vmul.f32 %v770, 0.5
  %v803 = vmul.f32 %v771, 0.5
  %v804 = vmul.f32 %v772, 0.5
  %v805 = vmul.f32 %v773, 0.5
  %v806 = vmul.f32 %v774, 0.5
  %v807 = vmul.f32 %v775, 0.5
  %v808 = vmul.f32 %v776, 0.5
  %v809 = vmul.f32 %v777, 0.5
  %v810 = vmul.f32 %v778, 0.5
  %v811 = vmul.f32 %v779, 0.5
  %v812 = vmul.f32 %v780, 0.5
  %v813 = vmul.f32 %v781, 0.5
  %v814 = vmul.f32 %v782, 0.5
  %v815 = vmul.f32 %v783, 0.5
  %v816 = vmul.f32 %v784, 0.5
  %v817 = vmul.f32 %v785, 0.5
  %v818 = vmul.f32 %v786, 0.5
  %v819 = vmul.f32 %v787, 0.5
  %v820 = vmul.f32 %v788, 0.5
  %v821 = vmul.f32 %v789, 0.5
  %v822 = vmul.f32 %v790, 0.5
  %v823 = vmul.f32 %v791, 0.5
  %v824 = vmul.f32 %v264, %v792
  %v825 = vmul.f32 %v267, %v793
  %v826 = vmul.f32 %v272, %v794
  %v827 = vmul.f32 %v275, %v795
  %v828 = vmul.f32 %v280, %v796
  %v829 = vmul.f32 %v283, %v797
  %v830 = vmul.f32 %v288, %v798
  %v831 = vmul.f32 %v291, %v799
  %v832 = vmul.f32 %v296, %v800
  %v833 = vmul.f32 %v299, %v801
  %v834 = vmul.f32 %v304, %v802
  %v835 = vmul.f32 %v307, %v803
  %v836 = vmul.f32 %v312, %v804
  %v837 = vmul.f32 %v315, %v805
  %v838 = vmul.f32 %v320, %v806
  %v839 = vmul.f32 %v323, %v807
  %v840 = vmul.f32 %v328, %v808
  %v841 = vmul.f32 %v331, %v809
  %v842 = vmul.f32 %v336, %v810
  %v843 = vmul.f32 %v339, %v811
  %v844 = vmul.f32 %v344, %v812
  %v845 = vmul.f32 %v347, %v813
  %v846 = vmul.f32 %v352, %v814
  %v847 = vmul.f32 %v355, %v815
  %v848 = vmul.f32 %v360, %v816
  %v849 = vmul.f32 %v363, %v817
  %v850 = vmul.f32 %v368, %v818
  %v851 = vmul.f32 %v371, %v819
  %v852 = vmul.f32 %v376, %v820
  %v853 = vmul.f32 %v379, %v821
  %v854 = vmul.f32 %v384, %v822
  %v855 = vmul.f32 %v387, %v823
  %v856 = vmul.f32 %v824, %v442
  %v857 = vmul.f32 %v825, %v445
  %v858 = vmul.f32 %v826, %v450
  %v859 = vmul.f32 %v827, %v453
  %v860 = vmul.f32 %v828, %v458
  %v861 = vmul.f32 %v829, %v461
  %v862 = vmul.f32 %v830, %v466
  %v863 = vmul.f32 %v831, %v469
  %v864 = vmul.f32 %v832, %v474
  %v865 = vmul.f32 %v833, %v477
  %v866 = vmul.f32 %v834, %v482
  %v867 = vmul.f32 %v835, %v485
  %v868 = vmul.f32 %v836, %v490
  %v869 = vmul.f32 %v837, %v493
  %v870 = vmul.f32 %v838, %v498
  %v871 = vmul.f32 %v839, %v501
  %v872 = vmul.f32 %v840, %v506
  %v873 = vmul.f32 %v841, %v509
  %v874 = vmul.f32 %v842, %v514
  %v875 = vmul.f32 %v843, %v517
  %v876 = vmul.f32 %v844, %v522
  %v877 = vmul.f32 %v845, %v525
  %v878 = vmul.f32 %v846, %v530
  %v879 = vmul.f32 %v847, %v533
  %v880 = vmul.f32 %v848, %v538
  %v881 = vmul.f32 %v849, %v541
  %v882 = vmul.f32 %v850, %v546
  %v883 = vmul.f32 %v851, %v549
  %v884 = vmul.f32 %v852, %v554
  %v885 = vmul.f32 %v853, %v557
  %v886 = vmul.f32 %v854, %v562
  %v887 = vmul.f32 %v855, %v565
  %v888 = vpack.c.bf16 %v857, %v856
  %v889 = vpack.c.bf16 %v859, %v858
  %v890 = vpack.c.bf16 %v861, %v860
  %v891 = vpack.c.bf16 %v863, %v862
  %v892 = vpack.c.bf16 %v865, %v864
  %v893 = vpack.c.bf16 %v867, %v866
  %v894 = vpack.c.bf16 %v869, %v868
  %v895 = vpack.c.bf16 %v871, %v870
  %v896 = vpack.c.bf16 %v873, %v872
  %v897 = vpack.c.bf16 %v875, %v874
  %v898 = vpack.c.bf16 %v877, %v876
  %v899 = vpack.c.bf16 %v879, %v878
  %v900 = vpack.c.bf16 %v881, %v880
  %v901 = vpack.c.bf16 %v883, %v882
  %v902 = vpack.c.bf16 %v885, %v884
  %v903 = vpack.c.bf16 %v887, %v886
  %v904 = vld [vmem:[#allocation2] sm:$0xff]
  %v905 = vld [vmem:[#allocation2 + $0x8] sm:$0xff]
  %v906 = vld [vmem:[#allocation2 + $0x10] sm:$0xff]
  %v907 = vld [vmem:[#allocation2 + $0x18] sm:$0xff]
  %v908 = vld [vmem:[#allocation2 + $0x20] sm:$0xff]
  %v909 = vld [vmem:[#allocation2 + $0x28] sm:$0xff]
  %v910 = vld [vmem:[#allocation2 + $0x30] sm:$0xff]
  %v911 = vld [vmem:[#allocation2 + $0x38] sm:$0xff]
  %v912 = vld [vmem:[#allocation2 + $0x40] sm:$0xff]
  %v913 = vld [vmem:[#allocation2 + $0x48] sm:$0xff]
  %v914 = vld [vmem:[#allocation2 + $0x50] sm:$0xff]
  %v915 = vld [vmem:[#allocation2 + $0x58] sm:$0xff]
  %v916 = vld [vmem:[#allocation2 + $0x60] sm:$0xff]
  %v917 = vld [vmem:[#allocation2 + $0x68] sm:$0xff]
  %v918 = vld [vmem:[#allocation2 + $0x70] sm:$0xff]
  %v919 = vld [vmem:[#allocation2 + $0x78] sm:$0xff]
  %v920 = vld [vmem:[#allocation2 + $0x80] sm:$0xff]
  %v921 = vld [vmem:[#allocation2 + $0x88] sm:$0xff]
  %v922 = vld [vmem:[#allocation2 + $0x90] sm:$0xff]
  %v923 = vld [vmem:[#allocation2 + $0x98] sm:$0xff]
  %v924 = vld [vmem:[#allocation2 + $0xa0] sm:$0xff]
  %v925 = vld [vmem:[#allocation2 + $0xa8] sm:$0xff]
  %v926 = vld [vmem:[#allocation2 + $0xb0] sm:$0xff]
  %v927 = vld [vmem:[#allocation2 + $0xb8] sm:$0xff]
  %v928 = vld [vmem:[#allocation2 + $0xc0] sm:$0xff]
  %v929 = vld [vmem:[#allocation2 + $0xc8] sm:$0xff]
  %v930 = vld [vmem:[#allocation2 + $0xd0] sm:$0xff]
  %v931 = vld [vmem:[#allocation2 + $0xd8] sm:$0xff]
  %v932 = vld [vmem:[#allocation2 + $0xe0] sm:$0xff]
  %v933 = vld [vmem:[#allocation2 + $0xe8] sm:$0xff]
  %v934 = vld [vmem:[#allocation2 + $0xf0] sm:$0xff]
  %v935 = vld [vmem:[#allocation2 + $0xf8] sm:$0xff]
  %v936 = vld [vmem:[%s2] sm:$0xf]
  %v937 = vld [vmem:[%s2 + $0x4] sm:$0xf]
  %v938 = vld [vmem:[%s2 + $0x8] sm:$0xf]
  %v939 = vld [vmem:[%s2 + $0xc] sm:$0xf]
  %v940 = vld [vmem:[%s2 + $0x10] sm:$0xf]
  %v941 = vld [vmem:[%s2 + $0x14] sm:$0xf]
  %v942 = vld [vmem:[%s2 + $0x18] sm:$0xf]
  %v943 = vld [vmem:[%s2 + $0x1c] sm:$0xf]
  %v944 = vld [vmem:[%s2 + $0x20] sm:$0xf]
  %v945 = vld [vmem:[%s2 + $0x24] sm:$0xf]
  %v946 = vld [vmem:[%s2 + $0x28] sm:$0xf]
  %v947 = vld [vmem:[%s2 + $0x2c] sm:$0xf]
  %v948 = vld [vmem:[%s2 + $0x30] sm:$0xf]
  %v949 = vld [vmem:[%s2 + $0x34] sm:$0xf]
  %v950 = vld [vmem:[%s2 + $0x38] sm:$0xf]
  %v951 = vld [vmem:[%s2 + $0x3c] sm:$0xf]
  %v968 = vunpack.c.l.b16 %v936
  %v969 = vunpack.c.l.b16 %v937
  %v970 = vunpack.c.l.b16 %v938
  %v971 = vunpack.c.l.b16 %v939
  %v972 = vunpack.c.l.b16 %v940
  %v973 = vunpack.c.l.b16 %v941
  %v974 = vunpack.c.l.b16 %v942
  %v975 = vunpack.c.l.b16 %v943
  %v976 = vunpack.c.l.b16 %v944
  %v977 = vunpack.c.l.b16 %v945
  %v978 = vunpack.c.l.b16 %v946
  %v979 = vunpack.c.l.b16 %v947
  %v980 = vunpack.c.l.b16 %v948
  %v981 = vunpack.c.l.b16 %v949
  %v982 = vunpack.c.l.b16 %v950
  %v983 = vunpack.c.l.b16 %v951
  %v984 = vpack.c.b16 %v969, %v968
  %v985 = vpack.c.b16 %v971, %v970
  %v986 = vpack.c.b16 %v973, %v972
  %v987 = vpack.c.b16 %v975, %v974
  %v988 = vpack.c.b16 %v977, %v976
  %v989 = vpack.c.b16 %v979, %v978
  %v990 = vpack.c.b16 %v981, %v980
  %v991 = vpack.c.b16 %v983, %v982
  %1000 = vmatprep.subr.bf16.mxu0 0
  %1001 = vmatpush1.bf16.msra.mxu0 %v984
  %1002 = vmatprep.subr.bf16.mxu0 0
  %1003 = vmatpush1.bf16.msra.mxu0 %v985
  %1004 = vmatprep.subr.bf16.mxu0 0
  %1005 = vmatpush1.bf16.msra.mxu0 %v986
  %1006 = vmatprep.subr.bf16.mxu0 0
  %1007 = vmatpush1.bf16.msra.mxu0 %v987
  %1008 = vmatprep.subr.bf16.mxu0 0
  %1009 = vmatpush1.bf16.msra.mxu0 %v988
  %1010 = vmatprep.subr.bf16.mxu0 0
  %1011 = vmatpush1.bf16.msra.mxu0 %v989
  %1012 = vmatprep.subr.bf16.mxu0 0
  %1013 = vmatpush1.bf16.msra.mxu0 %v990
  %1014 = vmatprep.subr.bf16.mxu0 0
  %1015 = vmatpush1.bf16.msra.mxu0 %v991
  %1016 = vmatprep.subr.bf16.mxu0 0
  %1017 = vmatpush1.bf16.msra.mxu0 0
  %1018 = vmatprep.subr.bf16.mxu0 0
  %1019 = vmatpush1.bf16.msra.mxu0 0
  %1020 = vmatprep.subr.bf16.mxu0 0
  %1021 = vmatpush1.bf16.msra.mxu0 0
  %1022 = vmatprep.subr.bf16.mxu0 0
  %1023 = vmatpush1.bf16.msra.mxu0 0
  %1024 = vmatprep.subr.bf16.mxu0 0
  %1025 = vmatpush1.bf16.msra.mxu0 0
  %1026 = vmatprep.subr.bf16.mxu0 0
  %1027 = vmatpush1.bf16.msra.mxu0 0
  %1028 = vmatprep.subr.bf16.mxu0 0
  %1029 = vmatpush1.bf16.msra.mxu0 0
  %1030 = vmatprep.subr.bf16.mxu0 0
  %1031 = vmatpush1.bf16.msra.mxu0 0
  %1032 = vmatprep.mubr.bf16.mxu0 0
  %1033 = vmatmul.mubr.bf16.gmra.mrb[0].mxu0 %v888
  %v1034 = vpop.f32.mrb[0].mxu0
  %v1035 = vadd.f32 0.0, %v1034
  %v1036 = vpop.f32.mrb[0].mxu0
  %v1037 = vpop.f32.mrb[0].mxu0
  %v1038 = vadd.f32 0.0, %v1037
  %v1039 = vpop.f32.mrb[0].mxu0
  %1040 = vmatprep.mubr.bf16.mxu0 0
  %1041 = vmatmul.mubr.bf16.gmra.mrb[0].mxu0 %v889
  %v1042 = vpop.f32.mrb[0].mxu0
  %v1043 = vadd.f32 0.0, %v1042
  %v1044 = vpop.f32.mrb[0].mxu0
  %v1045 = vpop.f32.mrb[0].mxu0
  %v1046 = vadd.f32 0.0, %v1045
  %v1047 = vpop.f32.mrb[0].mxu0
  %1048 = vmatprep.mubr.bf16.mxu0 0
  %1049 = vmatmul.mubr.bf16.gmra.mrb[0].mxu0 %v890
  %v1050 = vpop.f32.mrb[0].mxu0
  %v1051 = vadd.f32 0.0, %v1050
  %v1052 = vpop.f32.mrb[0].mxu0
  %v1053 = vpop.f32.mrb[0].mxu0
  %v1054 = vadd.f32 0.0, %v1053
  %v1055 = vpop.f32.mrb[0].mxu0
  %1056 = vmatprep.mubr.bf16.mxu0 0
  %1057 = vmatmul.mubr.bf16.gmra.mrb[0].mxu0 %v891
  %v1058 = vpop.f32.mrb[0].mxu0
  %v1059 = vadd.f32 0.0, %v1058
  %v1060 = vpop.f32.mrb[0].mxu0
  %v1061 = vpop.f32.mrb[0].mxu0
  %v1062 = vadd.f32 0.0, %v1061
  %v1063 = vpop.f32.mrb[0].mxu0
  %1064 = vmatprep.mubr.bf16.mxu0 0
  %1065 = vmatmul.mubr.bf16.gmra.mrb[0].mxu0 %v892
  %v1066 = vpop.f32.mrb[0].mxu0
  %v1067 = vadd.f32 0.0, %v1066
  %v1068 = vpop.f32.mrb[0].mxu0
  %v1069 = vpop.f32.mrb[0].mxu0
  %v1070 = vadd.f32 0.0, %v1069
  %v1071 = vpop.f32.mrb[0].mxu0
  %1072 = vmatprep.mubr.bf16.mxu0 0
  %1073 = vmatmul.mubr.bf16.gmra.mrb[0].mxu0 %v893
  %v1074 = vpop.f32.mrb[0].mxu0
  %v1075 = vadd.f32 0.0, %v1074
  %v1076 = vpop.f32.mrb[0].mxu0
  %v1077 = vpop.f32.mrb[0].mxu0
  %v1078 = vadd.f32 0.0, %v1077
  %v1079 = vpop.f32.mrb[0].mxu0
  %1080 = vmatprep.mubr.bf16.mxu0 0
  %1081 = vmatmul.mubr.bf16.gmra.mrb[0].mxu0 %v894
  %v1082 = vpop.f32.mrb[0].mxu0
  %v1083 = vadd.f32 0.0, %v1082
  %v1084 = vpop.f32.mrb[0].mxu0
  %v1085 = vpop.f32.mrb[0].mxu0
  %v1086 = vadd.f32 0.0, %v1085
  %v1087 = vpop.f32.mrb[0].mxu0
  %1088 = vmatprep.mubr.bf16.mxu0 0
  %1089 = vmatmul.mubr.bf16.gmra.mrb[0].mxu0 %v895
  %v1090 = vpop.f32.mrb[0].mxu0
  %v1091 = vadd.f32 0.0, %v1090
  %v1092 = vpop.f32.mrb[0].mxu0
  %v1093 = vpop.f32.mrb[0].mxu0
  %v1094 = vadd.f32 0.0, %v1093
  %v1095 = vpop.f32.mrb[0].mxu0
  %1096 = vmatprep.mubr.bf16.mxu0 0
  %1097 = vmatmul.mubr.bf16.gmra.mrb[0].mxu0 %v896
  %v1098 = vpop.f32.mrb[0].mxu0
  %v1099 = vadd.f32 0.0, %v1098
  %v1100 = vpop.f32.mrb[0].mxu0
  %v1101 = vpop.f32.mrb[0].mxu0
  %v1102 = vadd.f32 0.0, %v1101
  %v1103 = vpop.f32.mrb[0].mxu0
  %1104 = vmatprep.mubr.bf16.mxu0 0
  %1105 = vmatmul.mubr.bf16.gmra.mrb[0].mxu0 %v897
  %v1106 = vpop.f32.mrb[0].mxu0
  %v1107 = vadd.f32 0.0, %v1106
  %v1108 = vpop.f32.mrb[0].mxu0
  %v1109 = vpop.f32.mrb[0].mxu0
  %v1110 = vadd.f32 0.0, %v1109
  %v1111 = vpop.f32.mrb[0].mxu0
  %1112 = vmatprep.mubr.bf16.mxu0 0
  %1113 = vmatmul.mubr.bf16.gmra.mrb[0].mxu0 %v898
  %v1114 = vpop.f32.mrb[0].mxu0
  %v1115 = vadd.f32 0.0, %v1114
  %v1116 = vpop.f32.mrb[0].mxu0
  %v1117 = vpop.f32.mrb[0].mxu0
  %v1118 = vadd.f32 0.0, %v1117
  %v1119 = vpop.f32.mrb[0].mxu0
  %1120 = vmatprep.mubr.bf16.mxu0 0
  %1121 = vmatmul.mubr.bf16.gmra.mrb[0].mxu0 %v899
  %v1122 = vpop.f32.mrb[0].mxu0
  %v1123 = vadd.f32 0.0, %v1122
  %v1124 = vpop.f32.mrb[0].mxu0
  %v1125 = vpop.f32.mrb[0].mxu0
  %v1126 = vadd.f32 0.0, %v1125
  %v1127 = vpop.f32.mrb[0].mxu0
  %1128 = vmatprep.mubr.bf16.mxu0 0
  %1129 = vmatmul.mubr.bf16.gmra.mrb[0].mxu0 %v900
  %v1130 = vpop.f32.mrb[0].mxu0
  %v1131 = vadd.f32 0.0, %v1130
  %v1132 = vpop.f32.mrb[0].mxu0
  %v1133 = vpop.f32.mrb[0].mxu0
  %v1134 = vadd.f32 0.0, %v1133
  %v1135 = vpop.f32.mrb[0].mxu0
  %1136 = vmatprep.mubr.bf16.mxu0 0
  %1137 = vmatmul.mubr.bf16.gmra.mrb[0].mxu0 %v901
  %v1138 = vpop.f32.mrb[0].mxu0
  %v1139 = vadd.f32 0.0, %v1138
  %v1140 = vpop.f32.mrb[0].mxu0
  %v1141 = vpop.f32.mrb[0].mxu0
  %v1142 = vadd.f32 0.0, %v1141
  %v1143 = vpop.f32.mrb[0].mxu0
  %1144 = vmatprep.mubr.bf16.mxu0 0
  %1145 = vmatmul.mubr.bf16.gmra.mrb[0].mxu0 %v902
  %v1146 = vpop.f32.mrb[0].mxu0
  %v1147 = vadd.f32 0.0, %v1146
  %v1148 = vpop.f32.mrb[0].mxu0
  %v1149 = vpop.f32.mrb[0].mxu0
  %v1150 = vadd.f32 0.0, %v1149
  %v1151 = vpop.f32.mrb[0].mxu0
  %1152 = vmatprep.mubr.bf16.mxu0 0
  %1153 = vmatmul.mubr.bf16.gmra.mrb[0].mxu0 %v903
  %v1154 = vpop.f32.mrb[0].mxu0
  %v1155 = vadd.f32 0.0, %v1154
  %v1156 = vpop.f32.mrb[0].mxu0
  %v1157 = vpop.f32.mrb[0].mxu0
  %v1158 = vadd.f32 0.0, %v1157
  %v1159 = vpop.f32.mrb[0].mxu0
  %1160 = vdwg.mxu0
  %v1161 = vadd.f32 %v904, %v1035
  %v1162 = vadd.f32 %v905, %v1038
  %v1163 = vadd.f32 %v906, %v1043
  %v1164 = vadd.f32 %v907, %v1046
  %v1165 = vadd.f32 %v908, %v1051
  %v1166 = vadd.f32 %v909, %v1054
  %v1167 = vadd.f32 %v910, %v1059
  %v1168 = vadd.f32 %v911, %v1062
  %v1169 = vadd.f32 %v912, %v1067
  %v1170 = vadd.f32 %v913, %v1070
  %v1171 = vadd.f32 %v914, %v1075
  %v1172 = vadd.f32 %v915, %v1078
  %v1173 = vadd.f32 %v916, %v1083
  %v1174 = vadd.f32 %v917, %v1086
  %v1175 = vadd.f32 %v918, %v1091
  %v1176 = vadd.f32 %v919, %v1094
  %v1177 = vadd.f32 %v920, %v1099
  %v1178 = vadd.f32 %v921, %v1102
  %v1179 = vadd.f32 %v922, %v1107
  %v1180 = vadd.f32 %v923, %v1110
  %v1181 = vadd.f32 %v924, %v1115
  %v1182 = vadd.f32 %v925, %v1118
  %v1183 = vadd.f32 %v926, %v1123
  %v1184 = vadd.f32 %v927, %v1126
  %v1185 = vadd.f32 %v928, %v1131
  %v1186 = vadd.f32 %v929, %v1134
  %v1187 = vadd.f32 %v930, %v1139
  %v1188 = vadd.f32 %v931, %v1142
  %v1189 = vadd.f32 %v932, %v1147
  %v1190 = vadd.f32 %v933, %v1150
  %v1191 = vadd.f32 %v934, %v1155
  %v1192 = vadd.f32 %v935, %v1158
  %1193 = vst.msk [vmem:[#allocation2] sm:$0xff] %vm180, %v1161
  %1194 = vst.msk [vmem:[#allocation2 + $0x8] sm:$0xff] %vm180, %v1162
  %1195 = vst.msk [vmem:[#allocation2 + $0x10] sm:$0xff] %vm180, %v1163
  %1196 = vst.msk [vmem:[#allocation2 + $0x18] sm:$0xff] %vm180, %v1164
  %1197 = vst.msk [vmem:[#allocation2 + $0x20] sm:$0xff] %vm180, %v1165
  %1198 = vst.msk [vmem:[#allocation2 + $0x28] sm:$0xff] %vm180, %v1166
  %1199 = vst.msk [vmem:[#allocation2 + $0x30] sm:$0xff] %vm180, %v1167
  %1200 = vst.msk [vmem:[#allocation2 + $0x38] sm:$0xff] %vm180, %v1168
  %1201 = vst.msk [vmem:[#allocation2 + $0x40] sm:$0xff] %vm180, %v1169
  %1202 = vst.msk [vmem:[#allocation2 + $0x48] sm:$0xff] %vm180, %v1170
  %1203 = vst.msk [vmem:[#allocation2 + $0x50] sm:$0xff] %vm180, %v1171
  %1204 = vst.msk [vmem:[#allocation2 + $0x58] sm:$0xff] %vm180, %v1172
  %1205 = vst.msk [vmem:[#allocation2 + $0x60] sm:$0xff] %vm180, %v1173
  %1206 = vst.msk [vmem:[#allocation2 + $0x68] sm:$0xff] %vm180, %v1174
  %1207 = vst.msk [vmem:[#allocation2 + $0x70] sm:$0xff] %vm180, %v1175
  %1208 = vst.msk [vmem:[#allocation2 + $0x78] sm:$0xff] %vm180, %v1176
  %1209 = vst.msk [vmem:[#allocation2 + $0x80] sm:$0xff] %vm180, %v1177
  %1210 = vst.msk [vmem:[#allocation2 + $0x88] sm:$0xff] %vm180, %v1178
  %1211 = vst.msk [vmem:[#allocation2 + $0x90] sm:$0xff] %vm180, %v1179
  %1212 = vst.msk [vmem:[#allocation2 + $0x98] sm:$0xff] %vm180, %v1180
  %1213 = vst.msk [vmem:[#allocation2 + $0xa0] sm:$0xff] %vm180, %v1181
  %1214 = vst.msk [vmem:[#allocation2 + $0xa8] sm:$0xff] %vm180, %v1182
  %1215 = vst.msk [vmem:[#allocation2 + $0xb0] sm:$0xff] %vm180, %v1183
  %1216 = vst.msk [vmem:[#allocation2 + $0xb8] sm:$0xff] %vm180, %v1184
  %1217 = vst.msk [vmem:[#allocation2 + $0xc0] sm:$0xff] %vm180, %v1185
  %1218 = vst.msk [vmem:[#allocation2 + $0xc8] sm:$0xff] %vm180, %v1186
  %1219 = vst.msk [vmem:[#allocation2 + $0xd0] sm:$0xff] %vm180, %v1187
  %1220 = vst.msk [vmem:[#allocation2 + $0xd8] sm:$0xff] %vm180, %v1188
  %1221 = vst.msk [vmem:[#allocation2 + $0xe0] sm:$0xff] %vm180, %v1189
  %1222 = vst.msk [vmem:[#allocation2 + $0xe8] sm:$0xff] %vm180, %v1190
  %1223 = vst.msk [vmem:[#allocation2 + $0xf0] sm:$0xff] %vm180, %v1191
  %1224 = vst.msk [vmem:[#allocation2 + $0xf8] sm:$0xff] %vm180, %v1192
  // Predicated region
  $region18: #{gemma_mlp.1} parent=0 // pred_check
    %p1225 = pneg %p15
  $region19: #{gemma_mlp.1} parent=0 // pred_check_branch
    %1227 = sbr.rel (%p1225) target = $region21
  $region20: #{gemma_mlp.1} parent=0 // pred_region
    %v1228 = vld [vmem:[#allocation2] sm:$0xff]
    %v1229 = vld [vmem:[#allocation2 + $0x8] sm:$0xff]
    %v1230 = vld [vmem:[#allocation2 + $0x10] sm:$0xff]
    %v1231 = vld [vmem:[#allocation2 + $0x18] sm:$0xff]
    %v1232 = vld [vmem:[#allocation2 + $0x20] sm:$0xff]
    %v1233 = vld [vmem:[#allocation2 + $0x28] sm:$0xff]
    %v1234 = vld [vmem:[#allocation2 + $0x30] sm:$0xff]
    %v1235 = vld [vmem:[#allocation2 + $0x38] sm:$0xff]
    %v1236 = vld [vmem:[#allocation2 + $0x40] sm:$0xff]
    %v1237 = vld [vmem:[#allocation2 + $0x48] sm:$0xff]
    %v1238 = vld [vmem:[#allocation2 + $0x50] sm:$0xff]
    %v1239 = vld [vmem:[#allocation2 + $0x58] sm:$0xff]
    %v1240 = vld [vmem:[#allocation2 + $0x60] sm:$0xff]
    %v1241 = vld [vmem:[#allocation2 + $0x68] sm:$0xff]
    %v1242 = vld [vmem:[#allocation2 + $0x70] sm:$0xff]
    %v1243 = vld [vmem:[#allocation2 + $0x78] sm:$0xff]
    %v1244 = vld [vmem:[#allocation2 + $0x80] sm:$0xff]
    %v1245 = vld [vmem:[#allocation2 + $0x88] sm:$0xff]
    %v1246 = vld [vmem:[#allocation2 + $0x90] sm:$0xff]
    %v1247 = vld [vmem:[#allocation2 + $0x98] sm:$0xff]
    %v1248 = vld [vmem:[#allocation2 + $0xa0] sm:$0xff]
    %v1249 = vld [vmem:[#allocation2 + $0xa8] sm:$0xff]
    %v1250 = vld [vmem:[#allocation2 + $0xb0] sm:$0xff]
    %v1251 = vld [vmem:[#allocation2 + $0xb8] sm:$0xff]
    %v1252 = vld [vmem:[#allocation2 + $0xc0] sm:$0xff]
    %v1253 = vld [vmem:[#allocation2 + $0xc8] sm:$0xff]
    %v1254 = vld [vmem:[#allocation2 + $0xd0] sm:$0xff]
    %v1255 = vld [vmem:[#allocation2 + $0xd8] sm:$0xff]
    %v1256 = vld [vmem:[#allocation2 + $0xe0] sm:$0xff]
    %v1257 = vld [vmem:[#allocation2 + $0xe8] sm:$0xff]
    %v1258 = vld [vmem:[#allocation2 + $0xf0] sm:$0xff]
    %v1259 = vld [vmem:[#allocation2 + $0xf8] sm:$0xff]
    %1260 = vst.msk [vmem:[%s3] sm:$0xff] %vm180, %v1228
    %1261 = vst.msk [vmem:[%s3 + $0x8] sm:$0xff] %vm180, %v1229
    %1262 = vst.msk [vmem:[%s3 + $0x10] sm:$0xff] %vm180, %v1230
    %1263 = vst.msk [vmem:[%s3 + $0x18] sm:$0xff] %vm180, %v1231
    %1264 = vst.msk [vmem:[%s3 + $0x20] sm:$0xff] %vm180, %v1232
    %1265 = vst.msk [vmem:[%s3 + $0x28] sm:$0xff] %vm180, %v1233
    %1266 = vst.msk [vmem:[%s3 + $0x30] sm:$0xff] %vm180, %v1234
    %1267 = vst.msk [vmem:[%s3 + $0x38] sm:$0xff] %vm180, %v1235
    %1268 = vst.msk [vmem:[%s3 + $0x40] sm:$0xff] %vm180, %v1236
    %1269 = vst.msk [vmem:[%s3 + $0x48] sm:$0xff] %vm180, %v1237
    %1270 = vst.msk [vmem:[%s3 + $0x50] sm:$0xff] %vm180, %v1238
    %1271 = vst.msk [vmem:[%s3 + $0x58] sm:$0xff] %vm180, %v1239
    %1272 = vst.msk [vmem:[%s3 + $0x60] sm:$0xff] %vm180, %v1240
    %1273 = vst.msk [vmem:[%s3 + $0x68] sm:$0xff] %vm180, %v1241
    %1274 = vst.msk [vmem:[%s3 + $0x70] sm:$0xff] %vm180, %v1242
    %1275 = vst.msk [vmem:[%s3 + $0x78] sm:$0xff] %vm180, %v1243
    %1276 = vst.msk [vmem:[%s3 + $0x80] sm:$0xff] %vm180, %v1244
    %1277 = vst.msk [vmem:[%s3 + $0x88] sm:$0xff] %vm180, %v1245
    %1278 = vst.msk [vmem:[%s3 + $0x90] sm:$0xff] %vm180, %v1246
    %1279 = vst.msk [vmem:[%s3 + $0x98] sm:$0xff] %vm180, %v1247
    %1280 = vst.msk [vmem:[%s3 + $0xa0] sm:$0xff] %vm180, %v1248
    %1281 = vst.msk [vmem:[%s3 + $0xa8] sm:$0xff] %vm180, %v1249
    %1282 = vst.msk [vmem:[%s3 + $0xb0] sm:$0xff] %vm180, %v1250
    %1283 = vst.msk [vmem:[%s3 + $0xb8] sm:$0xff] %vm180, %v1251
    %1284 = vst.msk [vmem:[%s3 + $0xc0] sm:$0xff] %vm180, %v1252
    %1285 = vst.msk [vmem:[%s3 + $0xc8] sm:$0xff] %vm180, %v1253
    %1286 = vst.msk [vmem:[%s3 + $0xd0] sm:$0xff] %vm180, %v1254
    %1287 = vst.msk [vmem:[%s3 + $0xd8] sm:$0xff] %vm180, %v1255
    %1288 = vst.msk [vmem:[%s3 + $0xe0] sm:$0xff] %vm180, %v1256
    %1289 = vst.msk [vmem:[%s3 + $0xe8] sm:$0xff] %vm180, %v1257
    %1290 = vst.msk [vmem:[%s3 + $0xf0] sm:$0xff] %vm180, %v1258
    %1291 = vst.msk [vmem:[%s3 + $0xf8] sm:$0xff] %vm180, %v1259
  $region21: #{gemma_mlp.1} parent=0 // pred_fallthru
    _
  // Predicated region
  $region22: #{gemma_mlp.1} parent=0 // pred_check
    _
  $region23: #{gemma_mlp.1} parent=0 // pred_check_branch
    %1293 = sbr.rel (0) target = $region25
  $region24: #{gemma_mlp.1} parent=0 // pred_region
    _
  $region25: #{gemma_mlp.1} parent=0 // pred_fallthru
    _
  // Predicated region
  $region26: #{gemma_mlp.1} parent=0 // pred_check
    _
  $region27: #{gemma_mlp.1} parent=0 // pred_check_branch
    %1295 = sbr.rel (0) target = $region29
  $region28: #{gemma_mlp.1} parent=0 // pred_region
    _
  $region29: #{gemma_mlp.1} parent=0 // pred_fallthru
    _

</llo_original>
